<compile_context>
chip_gen: v7x
topology: tpu7x:2x2x1
jax: 0.10.0
libtpu: 0.0.40
codegen_flags: <defaults>
</compile_context>

<pallas_src>
import functools

import jax
import jax.numpy as jnp
from jax.experimental import pallas as pl
from jax.experimental.pallas import tpu as pltpu


def _critic_kernel(x_ref, w_ref, b_ref, o_ref, *, chunk_rows, num_chunks):
    # x_ref: [TB, F] (VMEM, streamed)    w_ref: [1, F] (VMEM, resident)
    # b_ref: [1, 1]  (SMEM)              o_ref: [1, TB] (VMEM, lane-dense)
    w = w_ref[...]
    b = b_ref[0, 0]
    for c in range(num_chunks):            # static, fully unrolled; each chunk's
        r0 = c * chunk_rows                # [1, C] result is stored immediately,
        xc = x_ref[pl.ds(r0, chunk_rows), :]   # keeping vreg pressure bounded.
        y = jax.lax.dot_general(
            w, xc,
            dimension_numbers=(((1,), (1,)), ((), ())),  # contract feature axes: w . xc^T
            preferred_element_type=jnp.float32,
        )                                   # [1, chunk_rows] f32
        o_ref[:, pl.ds(r0, chunk_rows)] = (y + b).astype(o_ref.dtype)


def _vmem_budgets():
    """Generation-aware (vmem_limit_bytes, double-buffered-feature-budget)."""
    mib = 1024 * 1024
    try:
        cap = getattr(pltpu.get_tpu_info(), "vmem_capacity_bytes", None)
    except Exception:  # pragma: no cover - defensive fallback off-TPU/old jax
        cap = None
    if cap is None:
        cap = 64 * mib  # conservative (v7x-sized) default
    if cap >= 96 * mib:          # v5e / v6e: 128 MiB physical VMEM
        return 64 * mib, 32 * mib
    else:                        # v7x: 64 MiB per TensorCore
        return 48 * mib, 32 * mib


def _select_tb(B, F, itemsize, feat_double_buf_budget):
    """Pick the batch tile TB from lane-padded VMEM bytes, not a row cap."""
    padded_row_bytes = pl.cdiv(F, 128) * 128 * itemsize   # (8,128)-tile lane padding
    tb_budget = feat_double_buf_budget // (2 * padded_row_bytes)
    if B < 128:
        return max(8, ((B + 7) // 8) * 8)                 # single tiny block
    tb = min(int(tb_budget), 32768)
    tb = max(128, (tb // 128) * 128)                       # lane-dense out blocks
    b_rounded = ((B + 127) // 128) * 128
    tb = min(tb, b_rounded)                                # never more than one block's worth
    if tb >= 2048:
        tb = (tb // 2048) * 2048                           # even 2048-lane chunking
    return tb


def _critic_forward_pallas(features, weight, bias):
    B, F = features.shape
    dtype = features.dtype
    itemsize = jnp.dtype(dtype).itemsize

    vmem_limit, feat_budget = _vmem_budgets()
    TB = _select_tb(B, F, itemsize, feat_budget)
    num_blocks = pl.cdiv(B, TB)
    Bp = num_blocks * TB                                   # padded *output* only

    chunk_rows = min(TB, 2048)
    num_chunks = TB // chunk_rows

    w_row = weight.reshape(1, F).astype(dtype)             # [1, F], features on lane axis
    b_smem = bias.reshape(1, 1).astype(jnp.float32)        # scalar bias -> SMEM

    kernel = functools.partial(_critic_kernel,
                               chunk_rows=chunk_rows, num_chunks=num_chunks)

    cost = pl.CostEstimate(
        flops=2 * B * F,
        transcendentals=0,
        bytes_accessed=B * F * itemsize + B * itemsize + F * itemsize,
    )

    out = pl.pallas_call(
        kernel,
        out_shape=jax.ShapeDtypeStruct((1, Bp), dtype),
        grid_spec=pltpu.PrefetchScalarGridSpec(
            num_scalar_prefetch=0,
            grid=(num_blocks,),
            in_specs=[
                pl.BlockSpec((TB, F), lambda i: (i, 0)),             # streamed features
                pl.BlockSpec((1, F), lambda i: (0, 0)),              # resident weight row
                pl.BlockSpec(memory_space=pltpu.MemorySpace.SMEM),   # bias scalar
            ],
            out_specs=pl.BlockSpec((1, TB), lambda i: (0, i)),       # lane-dense output row
        ),
        compiler_params=pltpu.CompilerParams(
            dimension_semantics=("parallel",),
            vmem_limit_bytes=vmem_limit,
        ),
        cost_estimate=cost,
    )(features, w_row, b_smem)

    return out[0, :B]                                      # drop padding + squeeze(-1)


def critic_forward(features, weight, bias, *, force_pallas=False):
    """features: [B, F]; weight: [1, F] (PyTorch nn.Linear layout); bias: [1].

    Returns: [B], same dtype as features — equals `self.head(features).squeeze(-1)`.
    """
    B, F = features.shape
    if not force_pallas and B < 512:
        # Tiny per-step RL batches: launch/slice overhead dominates a Pallas call;
        # a fused XLA GEMV is as fast or faster on all generations.
        y = features @ weight.reshape(F, 1).astype(features.dtype)
        return (y[:, 0] + bias[0]).astype(features.dtype)
    return _critic_forward_pallas(features, weight, bias)


if __name__ == "__main__":
    key = jax.random.PRNGKey(0)
    k_w, k_b, k_x1, k_x2 = jax.random.split(key, 4)

    feature_dim = 32
    bound = 1.0 / (feature_dim ** 0.5)
    weight = jax.random.uniform(k_w, (1, feature_dim), jnp.float32, -bound, bound)
    bias = jax.random.uniform(k_b, (1,), jnp.float32, -bound, bound)

    # 1) Small batch (typical RL step): XLA fast path + forced-Pallas cross-check.
    B1 = 8
    x1 = jax.random.normal(k_x1, (B1, feature_dim), dtype=jnp.float32)
    ref1 = (x1 @ weight.T)[:, 0] + bias[0]

    out1_xla = jax.block_until_ready(critic_forward(x1, weight, bias))
    out1_pl = jax.block_until_ready(critic_forward(x1, weight, bias, force_pallas=True))
    assert out1_xla.shape == (B1,) and out1_pl.shape == (B1,)
    assert jnp.allclose(out1_xla, ref1, atol=1e-5)
    assert jnp.allclose(out1_pl, ref1, atol=1e-5)

    # 2) Larger ragged batch: Pallas tiled path, no wrapper pad (tail block clipped).
    B2 = 1000
    x2 = jax.random.normal(k_x2, (B2, feature_dim), dtype=jnp.float32)
    ref2 = (x2 @ weight.T)[:, 0] + bias[0]

    out2 = jax.block_until_ready(critic_forward(x2, weight, bias))
    assert out2.shape == (B2,)
    assert jnp.allclose(out2, ref2, atol=1e-5)

    print("KERNEL_OK")
</pallas_src>

<mosaic_0001>
module attributes {stable_mosaic.version = 11 : i64} {
  func.func @_critic_kernel(%arg0: i32, %arg1: memref<8x32xf32, #tpu.memory_space<vmem>>, %arg2: memref<1x32xf32, #tpu.memory_space<vmem>>, %arg3: memref<1x1xf32, #tpu.memory_space<smem>>, %arg4: memref<1x8xf32, #tpu.memory_space<vmem>>) attributes {dimension_semantics = [#tpu.dimension_semantics<parallel>], iteration_bounds = array<i64: 1>, scalar_prefetch = 0 : i64, scratch_operands = 0 : i64, tpu.core_type = #tpu.core_type<tc>, window_params = [{transform_indices = @transform_0, window_bounds = array<i64: 8, 32>}, {pipeline_mode = #tpu.pipeline_mode<synchronous>, transform_indices = @transform_1, window_bounds = array<i64: 1, 32>}, {transform_indices = @transform_2, window_bounds = array<i64: 1, 1>}, {transform_indices = @transform_3, window_bounds = array<i64: 1, 8>}]} {
    %c0 = arith.constant 0 : index
    %c0_0 = arith.constant 0 : index
    %0 = vector.load %arg2[%c0, %c0_0] : memref<1x32xf32, #tpu.memory_space<vmem>>, vector<1x32xf32>
    %c0_1 = arith.constant 0 : index
    %c0_2 = arith.constant 0 : index
    %1 = memref.load %arg3[%c0_1, %c0_2] : memref<1x1xf32, #tpu.memory_space<smem>>
    %c0_3 = arith.constant 0 : index
    %c0_4 = arith.constant 0 : index
    %2 = vector.load %arg1[%c0_3, %c0_4] : memref<8x32xf32, #tpu.memory_space<vmem>>, vector<8x32xf32>
    %cst = arith.constant dense<0.000000e+00> : vector<1x8xf32>
    %3 = tpu.matmul %0, %2, %cst {dimension_numbers = #tpu.dot_dimension_numbers<[1], [1], [0], [0], [0, 0, 1, 0], [], []>} : vector<1x32xf32>, vector<8x32xf32>, vector<1x8xf32> -> vector<1x8xf32>
    %4 = vector.broadcast %1 : f32 to vector<1x8xf32>
    %5 = arith.addf %3, %4 : vector<1x8xf32>
    %c0_5 = arith.constant 0 : index
    %c0_6 = arith.constant 0 : index
    %6 = vector.load %arg4[%c0_5, %c0_6] : memref<1x8xf32, #tpu.memory_space<vmem>>, vector<1x8xf32>
    tpu.vector_store %arg4[%c0_5, %c0_6], %5 {strides = array<i32>} : memref<1x8xf32, #tpu.memory_space<vmem>>, vector<1x8xf32>,
    return
  }
  func.func @transform_0(%arg0: i32) -> (i32, i32) {
    %c0_i32 = arith.constant 0 : i32
    %c0_i32_0 = arith.constant 0 : i32
    return %arg0, %c0_i32 : i32, i32
  }
  func.func @transform_1(%arg0: i32) -> (i32, i32) {
    %c0_i32 = arith.constant 0 : i32
    %c0_i32_0 = arith.constant 0 : i32
    %c0_i32_1 = arith.constant 0 : i32
    return %c0_i32, %c0_i32_0 : i32, i32
  }
  func.func @transform_2(%arg0: i32) -> (i32, i32) {
    %c0_i32 = arith.constant 0 : i32
    %c0_i32_0 = arith.constant 0 : i32
    %c0_i32_1 = arith.constant 0 : i32
    return %c0_i32, %c0_i32_0 : i32, i32
  }
  func.func @transform_3(%arg0: i32) -> (i32, i32) {
    %c0_i32 = arith.constant 0 : i32
    %c0_i32_0 = arith.constant 0 : i32
    return %c0_i32, %arg0 : i32, i32
  }
}

</mosaic_0001>

<llo_original>
// kernel: tpu_custom_call.1
$region0: #{tpu_custom_call.1}
  #allocation0 [shape = 'u32[]', space=smem, size = 0x4, offset = 0x4, fixed_abs, tag = 'smem constant byte address 0x4 - core index']
  #allocation1 [shape = 'u32[144,128]{1,0:T(1,128)}', space=vmem, size = 0x12000, scoped, tag = 'internal scratch']
  #allocation2 [shape = 'f32[1,1]{1,0:T(1,128)S(6)}', space=smem, size = 0x200, scoped, tag = 'scoped memory for tpu_custom_call.1']
  %s0 = inlined_call_operand.hbm [shape: f32[8,32], index: 0, kind: input, shape index: {}]
  %s1 = inlined_call_operand.vmem [shape: f32[1,32], index: 1, kind: input, shape index: {}]
  %s2 = inlined_call_operand.<no memory space> [shape: f32[1,1], index: 2, kind: input, shape index: {}]
  %s3 = inlined_call_operand.hbm [shape: f32[1,8], index: 3, kind: output, shape index: {}]
  %s4 = sld [smem:[#allocation0]]
  $region26: #{tpu_custom_call.1} parent=0
    _
  %s6 = ssub.s32 1, %s4
  %s7 = scalar_select 0, %s6, %s4
  %8 = sst [smem:[#allocation2]] %s2
  $region1: #{tpu_custom_call.1} parent=0
    #allocation3 [shape = 'u8[4096]{0}', space=vmem, size = 0x1000, scoped, tag = 'input window, operand 0, single buffered']
    #allocation4 [shape = 's32[1]{0}', space=sflag, size = 0x4, scoped, tag = 'scoped memory for tpu_custom_call.1']
    #allocation5 [shape = 's32[1]{0}', space=sflag, size = 0x4, scoped, tag = 'scoped memory for tpu_custom_call.1']
    #allocation6 [shape = 'u8[512]{0}', space=vmem, size = 0x400, scoped, tag = 'output window, operand 0, single buffered']
    %9 = vsyncpa [#allocation4], 0
    %10 = vsyncpa [#allocation5], 0
    // Predicated region
    $region2: #{tpu_custom_call.1} parent=1 // pred_check
      _
    $region3: #{tpu_custom_call.1} parent=1 // pred_check_branch
      %12 = sbr.rel (0) target = $region5
    $region4: #{tpu_custom_call.1} parent=1 // pred_region
      %s14 = ssub.s32 128, 128
      %15 = vsyncadd [#allocation4], %s14
      %s17 = sshll.u32 [#allocation3], 4
      %s18 = int_to_ptr.vmem [resolvable:$true] %s17
      %20 = dma.hbm_to_vmem [thread:$0]  %s0, 128, %s18, [#allocation4]
    $region5: #{tpu_custom_call.1} parent=1 // pred_fallthru
      _
    // Predicated region
    $region6: #{tpu_custom_call.1} parent=1 // pred_check
      _
    $region7: #{tpu_custom_call.1} parent=1 // pred_check_branch
      %22 = sbr.rel (0) target = $region9
    $region8: #{tpu_custom_call.1} parent=1 // pred_region
      _
    $region9: #{tpu_custom_call.1} parent=1 // pred_fallthru
      _
    // Predicated region
    $region10: #{tpu_custom_call.1} parent=1 // pred_check
      _
    $region11: #{tpu_custom_call.1} parent=1 // pred_check_branch
      %24 = sbr.rel (0) target = $region13
    $region12: #{tpu_custom_call.1} parent=1 // pred_region
      _
    $region13: #{tpu_custom_call.1} parent=1 // pred_fallthru
      _
    // Predicated region
    $region14: #{tpu_custom_call.1} parent=1 // pred_check
      _
    $region15: #{tpu_custom_call.1} parent=1 // pred_check_branch
      %26 = sbr.rel (0) target = $region17
    $region16: #{tpu_custom_call.1} parent=1 // pred_region
      %27 = dma.done [#allocation4], 128
    $region17: #{tpu_custom_call.1} parent=1 // pred_fallthru
      _
    %v28 = vld [vmem:[%s1] sm:$0x1]
    %s29 = sld [smem:[#allocation2]]
    %v30 = vld [vmem:[#allocation3] sm:$0xff]
    %v31 = vstv %s29
    %vm32 = vcmask 261120
    %v34 = vsel %vm32, %v28, 0
    %v37 = vsel %vm32, %v30, 0
    %39 = vmatprep.subr.mxu0 0.0
    %40 = vmatpush1.xpose.msra.mxu0 %v37
    %41 = vmatprep.subr.mxu0 0.0
    %42 = vmatpush1.xpose.msra.mxu0 0.0
    %43 = vmatprep.subr.mxu0 0.0
    %44 = vmatpush1.xpose.msra.mxu0 0.0
    %45 = vmatprep.subr.mxu0 0.0
    %46 = vmatpush1.xpose.msra.mxu0 0.0
    %47 = vmatprep.subr.mxu0 0.0
    %48 = vmatpush1.xpose.msra.mxu0 0.0
    %49 = vmatprep.subr.mxu0 0.0
    %50 = vmatpush1.xpose.msra.mxu0 0.0
    %51 = vmatprep.subr.mxu0 0.0
    %52 = vmatpush1.xpose.msra.mxu0 0.0
    %53 = vmatprep.subr.mxu0 0.0
    %54 = vmatpush1.xpose.msra.mxu0 0.0
    %55 = vmatprep.subr.mxu0 0.0
    %56 = vmatpush1.xpose.msra.mxu0 0.0
    %57 = vmatprep.subr.mxu0 0.0
    %58 = vmatpush1.xpose.msra.mxu0 0.0
    %59 = vmatprep.subr.mxu0 0.0
    %60 = vmatpush1.xpose.msra.mxu0 0.0
    %61 = vmatprep.subr.mxu0 0.0
    %62 = vmatpush1.xpose.msra.mxu0 0.0
    %63 = vmatprep.subr.mxu0 0.0
    %64 = vmatpush1.xpose.msra.mxu0 0.0
    %65 = vmatprep.subr.mxu0 0.0
    %66 = vmatpush1.xpose.msra.mxu0 0.0
    %67 = vmatprep.subr.mxu0 0.0
    %68 = vmatpush1.xpose.msra.mxu0 0.0
    %69 = vmatprep.subr.mxu0 0.0
    %70 = vmatpush1.xpose.msra.mxu0 0.0
    %71 = vmatprep.subr.mxu0 0.0
    %72 = vmatpush1.xpose.msra.mxu0 0.0
    %73 = vmatprep.subr.mxu0 0.0
    %74 = vmatpush1.xpose.msra.mxu0 0.0
    %75 = vmatprep.subr.mxu0 0.0
    %76 = vmatpush1.xpose.msra.mxu0 0.0
    %77 = vmatprep.subr.mxu0 0.0
    %78 = vmatpush1.xpose.msra.mxu0 0.0
    %79 = vmatprep.subr.mxu0 0.0
    %80 = vmatpush1.xpose.msra.mxu0 0.0
    %81 = vmatprep.subr.mxu0 0.0
    %82 = vmatpush1.xpose.msra.mxu0 0.0
    %83 = vmatprep.subr.mxu0 0.0
    %84 = vmatpush1.xpose.msra.mxu0 0.0
    %85 = vmatprep.subr.mxu0 0.0
    %86 = vmatpush1.xpose.msra.mxu0 0.0
    %87 = vmatprep.subr.mxu0 0.0
    %88 = vmatpush1.xpose.msra.mxu0 0.0
    %89 = vmatprep.subr.mxu0 0.0
    %90 = vmatpush1.xpose.msra.mxu0 0.0
    %91 = vmatprep.subr.mxu0 0.0
    %92 = vmatpush1.xpose.msra.mxu0 0.0
    %93 = vmatprep.subr.mxu0 0.0
    %94 = vmatpush1.xpose.msra.mxu0 0.0
    %95 = vmatprep.subr.mxu0 0.0
    %96 = vmatpush1.xpose.msra.mxu0 0.0
    %97 = vmatprep.subr.mxu0 0.0
    %98 = vmatpush1.xpose.msra.mxu0 0.0
    %99 = vmatprep.subr.mxu0 0.0
    %100 = vmatpush1.xpose.msra.mxu0 0.0
    %101 = vmatprep.subr.mxu0 0.0
    %102 = vmatpush1.xpose.msra.mxu0 0.0
    %103 = vmatprep.mubr.f32.mxu0 0.0
    %104 = vmatmul.mubr.f32.gmra.mrb[0].mxu0 %v34
    %v105 = vpop.f32.mrb[0].mxu0
    %v106 = vadd.f32 %v31, %v105
    %v107 = vpop.f32.mrb[0].mxu0
    %108 = vdwg.mxu0
    %vm109 = vcmask 57344
    %110 = vst.msk [vmem:[#allocation6] sm:$0x1] %vm109, %v106
    // Predicated region
    $region18: #{tpu_custom_call.1} parent=1 // pred_check
      _
    $region19: #{tpu_custom_call.1} parent=1 // pred_check_branch
      %112 = sbr.rel (0) target = $region21
    $region20: #{tpu_custom_call.1} parent=1 // pred_region
      %s114 = ssub.s32 16, 16
      %115 = vsyncadd [#allocation5], %s114
      %s117 = sshll.u32 [#allocation6], 4
      %s118 = int_to_ptr.vmem [resolvable:$true] %s117
      %120 = dma.vmem_to_hbm [thread:$0]  %s118, 16, %s3, [#allocation5]
    $region21: #{tpu_custom_call.1} parent=1 // pred_fallthru
      _
    // Predicated region
    $region22: #{tpu_custom_call.1} parent=1 // pred_check
      _
    $region23: #{tpu_custom_call.1} parent=1 // pred_check_branch
      %122 = sbr.rel (0) target = $region25
    $region24: #{tpu_custom_call.1} parent=1 // pred_region
      %123 = dma.done [#allocation5], 16
    $region25: #{tpu_custom_call.1} parent=1 // pred_fallthru
      _
    %124 = vsyncpa [#allocation4], 1
    %125 = vsyncpa [#allocation5], 1

</llo_original>
